<compile_context>
chip_gen: v5e
topology: v5e:2x2
jax: 0.10.0
libtpu: 0.0.40
codegen_flags: <defaults>
</compile_context>

<pallas_src>
from collections import deque

import numpy as np

import jax
import jax.numpy as jnp
from jax.experimental import pallas as pl
from jax.experimental.pallas import tpu as pltpu


def _round_up(v, m):
    return ((v + m - 1) // m) * m


def _walk_tiling(bw, cap=512, mult=16):
    """Pick (tile, padded_total) for the walk-batch dimension.

    Keeps the minor dim of the int32 index block legal: either the tile equals the
    (padded) full dim, or it is a multiple of 128 (cap=512 satisfies this).
    """
    if bw <= cap:
        tb = _round_up(bw, mult)
        return tb, tb
    return cap, _round_up(bw, cap)


# ---------------------------------------------------------------------------
# Pallas kernel 1: fused feature encoder + GRU input projection.
#   gates = x @ W_comb + b_comb          (N, GP) bf16,  GP = round_up(3H, 128)
# ---------------------------------------------------------------------------
def encode_node_gates(x, w_comb_pad, b_comb_pad):
    n, d = x.shape
    gp = w_comb_pad.shape[1]
    tm = min(1024, _round_up(n, 16))

    def kernel(x_ref, w_ref, b_ref, o_ref):
        g = jnp.dot(x_ref[...], w_ref[...],
                    preferred_element_type=jnp.float32) + b_ref[...]
        o_ref[...] = g.astype(o_ref.dtype)

    # TODO(synk): the x tile (tm, D) is lane-sparse (D=8 of 128 lanes); acceptable
    # since the (tm, 128) output dominates bytes (review item: low priority).
    return pl.pallas_call(
        kernel,
        out_shape=jax.ShapeDtypeStruct((n, gp), jnp.bfloat16),
        grid=(pl.cdiv(n, tm),),
        in_specs=[
            pl.BlockSpec((tm, d), lambda i: (i, 0)),
            pl.BlockSpec((d, gp), lambda i: (0, 0)),   # weights stay resident
            pl.BlockSpec((1, gp), lambda i: (0, 0)),
        ],
        out_specs=pl.BlockSpec((tm, gp), lambda i: (i, 0)),
        compiler_params=pltpu.CompilerParams(dimension_semantics=("parallel",)),
    )(x, w_comb_pad, b_comb_pad)


# ---------------------------------------------------------------------------
# Shared GRU step (values in f32; one fused hidden-side MXU dot per step).
#   gx   : (tb, GP) input-side gate pre-activations, biases already included
#   w_hh : (H, GP)  concatenated hidden weights [r|z|n] (+ zero pad)
#   b_hn : (1, H)   the only bias left in the loop (b_hr/b_hz folded host-side)
# ---------------------------------------------------------------------------
def _gru_step(gx, h_prev, w_hh, b_hn, hid):
    hg = jnp.dot(h_prev, w_hh, preferred_element_type=jnp.float32)     # (tb, GP)
    rz = jax.nn.sigmoid(gx[:, :2 * hid] + hg[:, :2 * hid])             # fused r|z
    r = rz[:, :hid]
    z = rz[:, hid:]
    n = jnp.tanh(gx[:, 2 * hid:3 * hid] + r * (hg[:, 2 * hid:3 * hid] + b_hn))
    return (1.0 - z) * n + z * h_prev


# Fallback GRU kernel: consumes a pre-gathered, time-major bf16 gate stream.
def _gru_seq_kernel(xg_ref, whh_ref, bx_ref, bhn_ref, o_ref):
    t_steps, tb, gp = xg_ref.shape
    hid = o_ref.shape[1]
    w_hh = whh_ref[...]
    b_x = jnp.broadcast_to(bx_ref[...], (tb, gp))        # hoisted broadcast
    b_hn = bhn_ref[...]
    h_t = jnp.zeros((tb, hid), jnp.float32)
    for t in range(t_steps):                             # static unroll, T is small
        gx = xg_ref[t].astype(jnp.float32) + b_x
        h_t = _gru_step(gx, h_t, w_hh, b_hn, hid)
    o_ref[...] = h_t


# ---------------------------------------------------------------------------
# Pallas kernel 2: GRU over walks with the node->gate gather fused in-kernel.
# ---------------------------------------------------------------------------
def gru_final_state(x_gates, idx_tm, num_nodes, w_hh_pad, b_x, b_hn, tb):
    """x_gates: (N, GP) bf16 gate table; idx_tm: (T, Bw_pad) int32 (invalid = -1)."""
    t_steps, bw_pad = idx_tm.shape
    hid, gp = w_hh_pad.shape
    assert bw_pad % tb == 0
    grid = (bw_pad // tb,)
    n_tbl = x_gates.shape[0]

    common = dict(
        out_shape=jax.ShapeDtypeStruct((bw_pad, hid), jnp.float32),
        grid=grid,
        out_specs=pl.BlockSpec((tb, hid), lambda i: (i, 0)),
        compiler_params=pltpu.CompilerParams(dimension_semantics=("parallel",)),
    )

    def fused_kernel(idx_ref, tbl_ref, whh_ref, bx_ref, bhn_ref, o_ref):
        tbl = tbl_ref[...].astype(jnp.float32)           # (N, GP), VMEM-resident
        w_hh = whh_ref[...]
        bx = jnp.broadcast_to(bx_ref[...], (tb, gp))     # hoisted broadcast
        bhn = bhn_ref[...]
        h_t = jnp.zeros((tb, hid), jnp.float32)
        for t in range(t_steps):                         # static unroll, T is small
            idx = idx_ref[t]                             # (tb,) int32
            valid = (idx >= 0) & (idx < num_nodes)
            safe = jnp.clip(idx, 0, n_tbl - 1)
            gx = jnp.take(tbl, safe, axis=0, mode="clip")   # in-kernel row gather
            gx = jnp.where(valid[:, None], gx, 0.0) + bx    # zero-guard, then +b_ih
            h_t = _gru_step(gx, h_t, w_hh, bhn, hid)
        o_ref[...] = h_t

    # VMEM budget for the resident table (bf16 input buffers + f32 in-register
    # copy).  ~24 MiB keeps comfortable headroom even on v7x (64 MiB physical).
    table_fits = num_nodes * gp * 8 <= 24 * 2 ** 20
    if table_fits:
        try:
            fused = pl.pallas_call(
                fused_kernel,
                in_specs=[
                    pl.BlockSpec((t_steps, tb), lambda i: (0, i)),
                    pl.BlockSpec((n_tbl, gp), lambda i: (0, 0)),   # resident table
                    pl.BlockSpec((hid, gp), lambda i: (0, 0)),
                    pl.BlockSpec((1, gp), lambda i: (0, 0)),
                    pl.BlockSpec((1, hid), lambda i: (0, 0)),
                ],
                **common,
            )
            return jax.block_until_ready(
                fused(idx_tm, x_gates, w_hh_pad, b_x, b_hn))
        except Exception:
            # TODO(synk): in-kernel row gather not supported by this toolchain;
            # fall back to the streamed (pre-gathered) path below.
            pass

    # Fallback: XLA gather builds the (T, Bw_pad, GP) bf16 gate stream in HBM and a
    # streamed Pallas GRU kernel consumes it (same math; ~2 extra HBM passes).
    valid = (idx_tm >= 0) & (idx_tm < num_nodes)
    safe = jnp.clip(idx_tm, 0, num_nodes - 1)
    xg_seq = jnp.where(valid[..., None], x_gates[safe],
                       jnp.zeros((), x_gates.dtype))
    seq = pl.pallas_call(
        _gru_seq_kernel,
        in_specs=[
            pl.BlockSpec((t_steps, tb, gp), lambda i: (0, i, 0)),
            pl.BlockSpec((hid, gp), lambda i: (0, 0)),
            pl.BlockSpec((1, gp), lambda i: (0, 0)),
            pl.BlockSpec((1, hid), lambda i: (0, 0)),
        ],
        **common,
    )
    return jax.block_until_ready(seq(xg_seq, w_hh_pad, b_x, b_hn))


# ---------------------------------------------------------------------------
# Host-side random-walk sampling (matches the PyTorch reference logic).
# TODO(synk): BFS distances + multinomial walk sampling are inherently
#             data-dependent host control flow; no clean Pallas equivalent.
# ---------------------------------------------------------------------------
def _bfs_distances(adj, n, max_distance=4):
    adj_list = [np.nonzero(adj[i] > 0)[0].tolist() for i in range(n)]
    dist = np.full((n, n), max_distance + 1, dtype=np.float32)
    np.fill_diagonal(dist, 0)
    for start in range(n):
        visited = np.zeros(n, dtype=bool)
        q = deque([(start, 0)])
        visited[start] = True
        while q:
            node, d = q.popleft()
            if d >= max_distance:
                continue
            for nb in adj_list[node]:
                if not visited[nb]:
                    visited[nb] = True
                    dist[start, nb] = d + 1
                    q.append((nb, d + 1))
    return dist


def _walk_probabilities(dist, alpha, c, walk_type):
    n = dist.shape[0]
    if walk_type == 'exp':
        w = np.exp(-alpha * dist)
    elif walk_type == 'levy':
        sd = dist + 1e-6
        w = np.power(sd, -alpha)
        w[dist == 0] = 1e6
    else:
        raise ValueError(f'Unsupported walk type: {walk_type}')
    rs = w.sum(axis=1, keepdims=True)
    rs[rs == 0] = 1
    g = w / rs
    return (1 - c) * g + c * np.ones((n, n)) / n


def sample_random_walks(edge_index, batch, walk_length, num_walks, alpha, c,
                        walk_type, rng):
    walks, walk_batch = [], []
    batch_size = int(batch.max()) + 1
    for gi in range(batch_size):
        graph_nodes = np.nonzero(batch == gi)[0]
        if graph_nodes.size <= 1:
            continue
        node_set = set(graph_nodes.tolist())
        emask = np.array(
            [int(edge_index[0, e]) in node_set and int(edge_index[1, e]) in node_set
             for e in range(edge_index.shape[1])], dtype=bool)
        ge = edge_index[:, emask]
        if ge.size == 0:
            continue
        g2l = {int(v): i for i, v in enumerate(graph_nodes)}
        n = graph_nodes.size
        adj = np.zeros((n, n), dtype=np.float32)
        for e in range(ge.shape[1]):
            adj[g2l[int(ge[0, e])], g2l[int(ge[1, e])]] = 1.0
        dist = _bfs_distances(adj, n)
        probs = _walk_probabilities(dist, alpha, c, walk_type)
        if num_walks >= n:
            starts = np.arange(n)
        else:
            starts = rng.permutation(n)[:num_walks]
        for s in starts:
            cur = int(s)
            walk = [int(graph_nodes[cur])]
            for _ in range(walk_length - 1):
                p = probs[cur]
                p = p / p.sum()
                cur = int(rng.choice(n, p=p))
                walk.append(int(graph_nodes[cur]))
            walks.append(walk)
            walk_batch.append(gi)
    if not walks:
        return (np.zeros((1, walk_length), np.int64), np.zeros((1,), np.int64))
    return np.asarray(walks, np.int64), np.asarray(walk_batch, np.int64)


# ---------------------------------------------------------------------------
# Full forward pass
# ---------------------------------------------------------------------------
def explicit_random_walk_encoder_forward(x, edge_index, batch, params, cfg, rng):
    walks, walk_batch = sample_random_walks(
        edge_index, batch, cfg['walk_length'], cfg['num_walks'],
        cfg['alpha'], cfg['c'], cfg['walk_type'], rng)

    num_nodes = x.shape[0]

    # Pallas: per-node gate table (feature encoder + GRU input projection fused).
    x_gates = encode_node_gates(
        x, params['w_comb_pad'], params['b_comb_pad'])           # (N, GP) bf16

    # Time-major walk indices, padded along the walk-batch dim (pad idx = -1 ->
    # zero gate contribution, exactly the reference's 0 <= idx < N guard).
    walks_np = np.asarray(walks, np.int32)                        # (Bw, T)
    bw, t_steps = walks_np.shape
    tb, bw_pad = _walk_tiling(bw)
    idx_tm = np.full((t_steps, bw_pad), -1, np.int32)
    idx_tm[:, :bw] = walks_np.T
    idx_tm = jnp.asarray(idx_tm)

    # Pallas: GRU recurrence with the gather fused in-kernel; final state only.
    h_all = gru_final_state(x_gates, idx_tm, num_nodes,
                            params['w_hh_pad'], params['b_x'], params['b_hn'], tb)
    path_encodings = h_all[:bw]
    return path_encodings, jnp.asarray(walk_batch), walks


# Pure-JAX per-gate GRU reference (torch layout), fed precomputed x_t @ W_ih^T.
def _gru_ref_from_gates(gate_seq, w_hh, b_ih, b_hh, h):
    w_hr, w_hz, w_hn = w_hh[:h], w_hh[h:2 * h], w_hh[2 * h:]
    b_ir, b_iz, b_in = b_ih[:h], b_ih[h:2 * h], b_ih[2 * h:]
    b_hr, b_hz, b_hn = b_hh[:h], b_hh[h:2 * h], b_hh[2 * h:]
    hs = jnp.zeros((gate_seq.shape[0], h), jnp.float32)
    for t in range(gate_seq.shape[1]):
        g = gate_seq[:, t]
        r = jax.nn.sigmoid(g[:, :h] + b_ir + hs @ w_hr.T + b_hr)
        z = jax.nn.sigmoid(g[:, h:2 * h] + b_iz + hs @ w_hz.T + b_hz)
        n = jnp.tanh(g[:, 2 * h:] + b_in + r * (hs @ w_hn.T + b_hn))
        hs = (1.0 - z) * n + z * hs
    return hs


# ---------------------------------------------------------------------------
if __name__ == "__main__":
    # config (small, consistent with the module __init__)
    input_dim, hidden_dim = 8, 32
    walk_length, num_walks = 6, 4
    cfg = dict(walk_length=walk_length, num_walks=num_walks,
               alpha=1.0, c=0.15, walk_type='exp')

    # deterministic synthetic graph: 2 ring graphs of 10 nodes each
    nodes_per_graph, num_graphs = 10, 2
    num_nodes = nodes_per_graph * num_graphs
    src, dst = [], []
    for g in range(num_graphs):
        base = g * nodes_per_graph
        for i in range(nodes_per_graph):
            a, b = base + i, base + (i + 1) % nodes_per_graph
            src += [a, b]
            dst += [b, a]
    edge_index = np.stack([np.asarray(src), np.asarray(dst)]).astype(np.int64)
    batch = np.repeat(np.arange(num_graphs), nodes_per_graph).astype(np.int64)

    # deterministic inputs / parameters (torch layouts)
    key = jax.random.PRNGKey(0)
    kx, k1, k2, k3, k4, k5, k6 = jax.random.split(key, 7)
    x = jax.random.normal(kx, (num_nodes, input_dim), jnp.float32)

    bound_fe = 1.0 / np.sqrt(input_dim)
    bound_h = 1.0 / np.sqrt(hidden_dim)
    fe_w = jax.random.uniform(k1, (hidden_dim, input_dim), jnp.float32,
                              -bound_fe, bound_fe)              # Linear.weight
    fe_b = jax.random.uniform(k2, (1, hidden_dim), jnp.float32, -bound_fe, bound_fe)
    w_ih = jax.random.uniform(k3, (3 * hidden_dim, hidden_dim), jnp.float32,
                              -bound_h, bound_h)                # GRU.weight_ih_l0
    w_hh = jax.random.uniform(k4, (3 * hidden_dim, hidden_dim), jnp.float32,
                              -bound_h, bound_h)                # GRU.weight_hh_l0
    b_ih = jax.random.uniform(k5, (3 * hidden_dim,), jnp.float32, -bound_h, bound_h)
    b_hh = jax.random.uniform(k6, (3 * hidden_dim,), jnp.float32, -bound_h, bound_h)

    # ---- host-side parameter folding / lane padding -----------------------
    H, D = hidden_dim, input_dim
    G3 = 3 * H
    GP = _round_up(G3, 128)                                     # 96 -> 128 lanes

    w_comb = fe_w.T @ w_ih.T                                    # (D, 3H)
    b_comb = fe_b @ w_ih.T                                      # (1, 3H)

    w_comb_pad = jnp.zeros((D, GP), jnp.float32).at[:, :G3].set(w_comb)
    b_comb_pad = jnp.zeros((1, GP), jnp.float32).at[:, :G3].set(b_comb)
    w_hh_pad = jnp.zeros((H, GP), jnp.float32).at[:, :G3].set(w_hh.T)
    b_x = jnp.zeros((1, GP), jnp.float32)
    b_x = b_x.at[0, :2 * H].set(b_ih[:2 * H] + b_hh[:2 * H])    # b_hr/b_hz folded
    b_x = b_x.at[0, 2 * H:G3].set(b_ih[2 * H:])
    b_hn = b_hh[2 * H:].reshape(1, H)

    params = dict(w_comb_pad=w_comb_pad, b_comb_pad=b_comb_pad,
                  w_hh_pad=w_hh_pad, b_x=b_x, b_hn=b_hn)

    rng = np.random.default_rng(0)
    path_enc, walk_batch, walks = explicit_random_walk_encoder_forward(
        x, edge_index, batch, params, cfg, rng)
    path_enc = jax.block_until_ready(path_enc)

    # --- verification -------------------------------------------------------
    # Kernel 1 vs reference (fused projection, bf16 storage tolerance).
    gates_f32 = x @ w_comb + b_comb                              # (N, 3H) f32
    x_gates_k = encode_node_gates(x, w_comb_pad, b_comb_pad)     # (N, GP) bf16
    np.testing.assert_allclose(
        np.asarray(x_gates_k[:, :G3].astype(jnp.float32)),
        np.asarray(gates_f32.astype(jnp.bfloat16).astype(jnp.float32)),
        rtol=1e-2, atol=1e-2)

    # GRU kernel vs per-gate reference fed the kernel's own (bf16) gate table.
    wj = jnp.asarray(walks, jnp.int32)                           # (Bw, T)
    valid = (wj >= 0) & (wj < num_nodes)
    safe = jnp.clip(wj, 0, num_nodes - 1)
    tbl_k = x_gates_k[:, :G3].astype(jnp.float32)
    gseq_k = jnp.where(valid[..., None], tbl_k[safe], 0.0)       # (Bw, T, 3H)
    h_ref_k = _gru_ref_from_gates(gseq_k, w_hh, b_ih, b_hh, H)
    np.testing.assert_allclose(np.asarray(path_enc), np.asarray(h_ref_k),
                               rtol=5e-3, atol=5e-3)

    # Loose end-to-end check against the full-f32 (torch-exact) pipeline,
    # covering the bf16 storage of the gate table.
    gseq_f = jnp.where(valid[..., None], gates_f32[safe], 0.0)
    h_ref_f = _gru_ref_from_gates(gseq_f, w_hh, b_ih, b_hh, H)
    np.testing.assert_allclose(np.asarray(path_enc), np.asarray(h_ref_f),
                               rtol=3e-2, atol=3e-2)

    assert path_enc.shape == (num_graphs * num_walks, hidden_dim)
    assert walk_batch.shape == (num_graphs * num_walks,)
    print("KERNEL_OK")
</pallas_src>

<mosaic_0001>
module attributes {stable_mosaic.version = 11 : i64} {
  func.func @kernel(%arg0: i32, %arg1: memref<32x8xf32, #tpu.memory_space<vmem>>, %arg2: memref<8x128xf32, #tpu.memory_space<vmem>>, %arg3: memref<1x128xf32, #tpu.memory_space<vmem>>, %arg4: memref<32x128xbf16, #tpu.memory_space<vmem>>) attributes {dimension_semantics = [#tpu.dimension_semantics<parallel>], iteration_bounds = array<i64: 1>, scalar_prefetch = 0 : i64, scratch_operands = 0 : i64, tpu.core_type = #tpu.core_type<tc>, window_params = [{transform_indices = @transform_0, window_bounds = array<i64: 32, 8>}, {pipeline_mode = #tpu.pipeline_mode<synchronous>, transform_indices = @transform_1, window_bounds = array<i64: 8, 128>}, {pipeline_mode = #tpu.pipeline_mode<synchronous>, transform_indices = @transform_2, window_bounds = array<i64: 1, 128>}, {transform_indices = @transform_3, window_bounds = array<i64: 32, 128>}]} {
    %c0 = arith.constant 0 : index
    %c0_0 = arith.constant 0 : index
    %0 = vector.load %arg1[%c0, %c0_0] : memref<32x8xf32, #tpu.memory_space<vmem>>, vector<32x8xf32>
    %c0_1 = arith.constant 0 : index
    %c0_2 = arith.constant 0 : index
    %1 = vector.load %arg2[%c0_1, %c0_2] : memref<8x128xf32, #tpu.memory_space<vmem>>, vector<8x128xf32>
    %cst = arith.constant dense<0.000000e+00> : vector<32x128xf32>
    %2 = tpu.matmul %0, %1, %cst {dimension_numbers = #tpu.dot_dimension_numbers<[1], [0], [0], [1], [0, 0, 1, 1], [], []>} : vector<32x8xf32>, vector<8x128xf32>, vector<32x128xf32> -> vector<32x128xf32>
    %c0_3 = arith.constant 0 : index
    %c0_4 = arith.constant 0 : index
    %3 = vector.load %arg3[%c0_3, %c0_4] : memref<1x128xf32, #tpu.memory_space<vmem>>, vector<1x128xf32>
    %4 = vector.broadcast %3 : vector<1x128xf32> to vector<32x128xf32>
    %5 = arith.addf %2, %4 : vector<32x128xf32>
    %6 = arith.truncf %5 : vector<32x128xf32> to vector<32x128xbf16>
    %c0_5 = arith.constant 0 : index
    %c0_6 = arith.constant 0 : index
    %7 = vector.load %arg4[%c0_5, %c0_6] : memref<32x128xbf16, #tpu.memory_space<vmem>>, vector<32x128xbf16>
    tpu.vector_store %arg4[%c0_5, %c0_6], %6 {strides = array<i32>} : memref<32x128xbf16, #tpu.memory_space<vmem>>, vector<32x128xbf16>,
    return
  }
  func.func @transform_0(%arg0: i32) -> (i32, i32) {
    %c0_i32 = arith.constant 0 : i32
    %c0_i32_0 = arith.constant 0 : i32
    return %arg0, %c0_i32 : i32, i32
  }
  func.func @transform_1(%arg0: i32) -> (i32, i32) {
    %c0_i32 = arith.constant 0 : i32
    %c0_i32_0 = arith.constant 0 : i32
    %c0_i32_1 = arith.constant 0 : i32
    return %c0_i32, %c0_i32_0 : i32, i32
  }
  func.func @transform_2(%arg0: i32) -> (i32, i32) {
    %c0_i32 = arith.constant 0 : i32
    %c0_i32_0 = arith.constant 0 : i32
    %c0_i32_1 = arith.constant 0 : i32
    return %c0_i32, %c0_i32_0 : i32, i32
  }
  func.func @transform_3(%arg0: i32) -> (i32, i32) {
    %c0_i32 = arith.constant 0 : i32
    %c0_i32_0 = arith.constant 0 : i32
    return %arg0, %c0_i32 : i32, i32
  }
}

</mosaic_0001>

<llo_original>
// kernel: tpu_custom_call.1
$region0: #{tpu_custom_call.1}
  #allocation0 [shape = 'u32[]', space=smem, size = 0x4, offset = 0x4, fixed_abs, tag = 'smem constant byte address 0x4 - core index']
  #allocation1 [shape = 'u32[72,128]{1,0:T(1,128)}', space=vmem, size = 0x9000, scoped, tag = 'internal scratch']
  %s0 = inlined_call_operand.vmem [shape: f32[20,8], index: 0, kind: input, shape index: {}]
  %s1 = inlined_call_operand.vmem [shape: f32[8,128], index: 1, kind: input, shape index: {}]
  %s2 = inlined_call_operand.vmem [shape: f32[1,128], index: 2, kind: input, shape index: {}]
  %s3 = inlined_call_operand.hbm [shape: bf16[20,128], index: 3, kind: output, shape index: {}]
  %s4 = sld [smem:[#allocation0]]
  $region22: #{tpu_custom_call.1} parent=0
    _
  %s6 = ssub.s32 1, %s4
  %s7 = scalar_select 0, %s6, %s4
  $region1: #{tpu_custom_call.1} parent=0
    #allocation2 [shape = 'u8[8192]{0}', space=vmem, size = 0x2000, scoped, tag = 'output window, operand 0, single buffered']
    #allocation3 [shape = 's32[1]{0}', space=sflag, size = 0x4, scoped, tag = 'scoped memory for tpu_custom_call.1']
    %8 = vsyncpa [#allocation3], 0
    // Predicated region
    $region2: #{tpu_custom_call.1} parent=1 // pred_check
      _
    $region3: #{tpu_custom_call.1} parent=1 // pred_check_branch
      %10 = sbr.rel (0) target = $region5
    $region4: #{tpu_custom_call.1} parent=1 // pred_region
      _
    $region5: #{tpu_custom_call.1} parent=1 // pred_fallthru
      _
    // Predicated region
    $region6: #{tpu_custom_call.1} parent=1 // pred_check
      _
    $region7: #{tpu_custom_call.1} parent=1 // pred_check_branch
      %12 = sbr.rel (0) target = $region9
    $region8: #{tpu_custom_call.1} parent=1 // pred_region
      _
    $region9: #{tpu_custom_call.1} parent=1 // pred_fallthru
      _
    // Predicated region
    $region10: #{tpu_custom_call.1} parent=1 // pred_check
      _
    $region11: #{tpu_custom_call.1} parent=1 // pred_check_branch
      %14 = sbr.rel (0) target = $region13
    $region12: #{tpu_custom_call.1} parent=1 // pred_region
      _
    $region13: #{tpu_custom_call.1} parent=1 // pred_fallthru
      _
    %v15 = vld [vmem:[%s0] sm:$0xff]
    %v16 = vld [vmem:[%s0 + $0x8] sm:$0xff]
    %v17 = vld [vmem:[%s0 + $0x10] sm:$0xff]
    %v18 = vld [vmem:[%s0 + $0x18] sm:$0xff]
    %v19 = vld [vmem:[%s1] sm:$0xff]
    %v20 = vld [vmem:[%s2] sm:$0x1]
    %v22 = vperm.slane %v20, 0
    %vm24 = vcmask 64512
    %v26 = vsel %vm24, %v15, 0
    %v29 = vsel %vm24, %v16, 0
    %v32 = vsel %vm24, %v17, 0
    %v35 = vsel %vm24, %v18, 0
    %37 = vmatpush.msra.mxu0 0.0
    %38 = vmatpush.msra.mxu0 0.0
    %39 = vmatpush.msra.mxu0 0.0
    %40 = vmatpush.msra.mxu0 0.0
    %41 = vmatpush.msra.mxu0 0.0
    %42 = vmatpush.msra.mxu0 0.0
    %43 = vmatpush.msra.mxu0 0.0
    %44 = vmatpush.msra.mxu0 0.0
    %45 = vmatpush.msra.mxu0 0.0
    %46 = vmatpush.msra.mxu0 0.0
    %47 = vmatpush.msra.mxu0 0.0
    %48 = vmatpush.msra.mxu0 0.0
    %49 = vmatpush.msra.mxu0 0.0
    %50 = vmatpush.msra.mxu0 0.0
    %51 = vmatpush.msra.mxu0 0.0
    %52 = vmatpush.msra.mxu0 %v19
    %53 = vmatmul.f32.gmra.mxu0 %v26
    %v54 = vpop.f32.mrf.mxu0
    %v55 = vadd.f32 %v22, %v54
    %56 = vmatmul.f32.gmra.mxu0 %v29
    %v57 = vpop.f32.mrf.mxu0
    %v58 = vadd.f32 %v22, %v57
    %59 = vmatmul.f32.gmra.mxu0 %v32
    %v60 = vpop.f32.mrf.mxu0
    %v61 = vadd.f32 %v22, %v60
    %62 = vmatmul.f32.gmra.mxu0 %v35
    %v63 = vpop.f32.mrf.mxu0
    %v64 = vadd.f32 %v22, %v63
    %65 = vdwg.mxu0
    %v66 = vpack.c.bf16 %v55, %v55
    %v67 = vpack.c.bf16 %v58, %v58
    %v68 = vpack.c.bf16 %v61, %v61
    %v69 = vpack.c.bf16 %v64, %v64
    %70 = vst [vmem:[#allocation2] sm:$0xf] %v66
    %71 = vst [vmem:[#allocation2 + $0x4] sm:$0xf] %v67
    %72 = vst [vmem:[#allocation2 + $0x8] sm:$0xf] %v68
    %73 = vst [vmem:[#allocation2 + $0xc] sm:$0xf] %v69
    // Predicated region
    $region14: #{tpu_custom_call.1} parent=1 // pred_check
      _
    $region15: #{tpu_custom_call.1} parent=1 // pred_check_branch
      %75 = sbr.rel (0) target = $region17
    $region16: #{tpu_custom_call.1} parent=1 // pred_region
      %77 = vsyncadd [#allocation3], 64
      %s78 = sshll.u32 [#allocation2], 4
      %s79 = int_to_ptr.vmem [resolvable:$true] %s78
      %s80 = sshll.u32 %s3, 4
      %s81 = int_to_ptr.hbm [resolvable:$true] %s80
      %86 = dma.vmem_to_hbm [thread:$0]  %s79, 192, %s81, [#allocation3], 64, 64, 4
    $region17: #{tpu_custom_call.1} parent=1 // pred_fallthru
      _
    // Predicated region
    $region18: #{tpu_custom_call.1} parent=1 // pred_check
      _
    $region19: #{tpu_custom_call.1} parent=1 // pred_check_branch
      %88 = sbr.rel (0) target = $region21
    $region20: #{tpu_custom_call.1} parent=1 // pred_region
      %90 = dma.done [#allocation3], 256
    $region21: #{tpu_custom_call.1} parent=1 // pred_fallthru
      _
    %91 = vsyncpa [#allocation3], 1

</llo_original>
